<compile_context>
chip_gen: v7x
topology: tpu7x:2x2x1
jax: 0.10.0
libtpu: 0.0.40
codegen_flags: <defaults>
</compile_context>

<pallas_src>
import jax
import jax.numpy as jnp
from jax.experimental import pallas as pl
from jax.experimental.pallas import tpu as pltpu

INPUT_SIZE = 16
HIDDEN_SIZE = 32
NUM_CLASSES = 16
SEQ_LEN = 8
BATCH = 2

# Packed-parameter slab layout (f32, shape (96, 32)):
#   rows  0:16           -> W_ih^T  (D=16, H=32)
#   rows 16:48           -> W_hh^T  (H=32, H=32)
#   row  48              -> b_ih + b_hh          (1, 32)
#   rows 56:88, cols :16 -> W_fc^T (H=32, C=16)
#   row  88,   cols :16  -> b_fc                 (1, 16)
_SLAB_ROWS = 96
_SLAB_COLS = 32


def rnn_classifier_kernel(x_ref, p_ref, out_ref):
    """Elman RNN (tanh) over T steps + Linear on the final hidden state.

    x_ref : (B, T, D)  batch-major input (as supplied by the caller)
    p_ref : (96, 32)   packed parameter slab (see layout above)
    out   : (B, C)     logits
    """
    # Static slices of the packed slab (zero-cost ref views -> loads).
    w_ih = p_ref[0:16, :]                    # (D, H)
    w_hh = p_ref[16:48, :]                   # (H, H)
    b = p_ref[48:49, :]                      # (1, H) == b_ih + b_hh
    w_fc = p_ref[56:88, 0:NUM_CLASSES]       # (H, C)
    b_fc = p_ref[88:89, 0:NUM_CLASSES]       # (1, C)

    batch, seq_len, d = x_ref.shape

    # Hoisted input projection: one MXU matmul covers all time steps, and the
    # (b_ih + b_hh) bias broadcast happens exactly once (folded into xw).
    x = x_ref[...].reshape(batch * seq_len, d)                        # (B*T, D)
    xw = jnp.dot(x, w_ih, preferred_element_type=jnp.float32) + b     # (B*T, H)
    xw = xw.reshape(batch, seq_len, HIDDEN_SIZE)                      # (B, T, H)

    # Recurrence: one (B,H)@(H,H) matmul + one tanh per step on the serial
    # dependency chain. Tiny static trip count -> unroll at trace time.
    h = jnp.zeros((batch, HIDDEN_SIZE), jnp.float32)
    for t in range(seq_len):
        h = jnp.tanh(
            xw[:, t, :]
            + jnp.dot(h, w_hh, preferred_element_type=jnp.float32))

    # fc(out[:, -1, :])
    logits = jnp.dot(h, w_fc, preferred_element_type=jnp.float32) + b_fc
    out_ref[...] = logits.astype(out_ref.dtype)


def pack_params(w_ih, w_hh, b_ih, b_hh, w_fc, b_fc):
    """One-time packing: transpose weights, fold biases, build one f32 slab."""
    slab = jnp.zeros((_SLAB_ROWS, _SLAB_COLS), jnp.float32)
    slab = slab.at[0:16, :].set(jnp.transpose(w_ih))                # (D, H)
    slab = slab.at[16:48, :].set(jnp.transpose(w_hh))               # (H, H)
    slab = slab.at[48, :].set(b_ih + b_hh)                          # (H,)
    slab = slab.at[56:88, 0:NUM_CLASSES].set(jnp.transpose(w_fc))   # (H, C)
    slab = slab.at[88, 0:NUM_CLASSES].set(b_fc)                     # (C,)
    return slab


def rnn_classifier(x, param_slab):
    """Wrapper: single Pallas launch, no host-side reshapes/transposes."""
    b, t, d = x.shape
    assert d == INPUT_SIZE

    vmem = pl.BlockSpec(memory_space=pltpu.MemorySpace.VMEM)
    return pl.pallas_call(
        rnn_classifier_kernel,
        out_shape=jax.ShapeDtypeStruct((b, NUM_CLASSES), jnp.float32),
        in_specs=[vmem, vmem],
        out_specs=vmem,
    )(x, param_slab)
    # TODO(synk): if batch grows beyond toy size, add a "parallel" batch grid
    # axis (per-block x/out BlockSpecs, replicated slab) to use both v7x TCs.


def init_params(key):
    """Deterministic init matching torch's shapes: U(-1/sqrt(H), 1/sqrt(H))."""
    bound = 1.0 / jnp.sqrt(jnp.float32(HIDDEN_SIZE))
    ks = jax.random.split(key, 6)
    w_ih = jax.random.uniform(ks[0], (HIDDEN_SIZE, INPUT_SIZE), jnp.float32,
                              -bound, bound)
    w_hh = jax.random.uniform(ks[1], (HIDDEN_SIZE, HIDDEN_SIZE), jnp.float32,
                              -bound, bound)
    b_ih = jax.random.uniform(ks[2], (HIDDEN_SIZE,), jnp.float32, -bound, bound)
    b_hh = jax.random.uniform(ks[3], (HIDDEN_SIZE,), jnp.float32, -bound, bound)
    w_fc = jax.random.uniform(ks[4], (NUM_CLASSES, HIDDEN_SIZE), jnp.float32,
                              -bound, bound)
    b_fc = jax.random.uniform(ks[5], (NUM_CLASSES,), jnp.float32, -bound, bound)
    return w_ih, w_hh, b_ih, b_hh, w_fc, b_fc


def reference(x, w_ih, w_hh, b_ih, b_hh, w_fc, b_fc):
    """Pure-JAX reference of the PyTorch forward (for correctness check)."""
    b = x.shape[0]
    h = jnp.zeros((b, HIDDEN_SIZE), jnp.float32)
    for t in range(x.shape[1]):
        h = jnp.tanh(x[:, t, :] @ w_ih.T + b_ih + h @ w_hh.T + b_hh)
    return h @ w_fc.T + b_fc


if __name__ == "__main__":
    key = jax.random.PRNGKey(0)
    k_x, k_p = jax.random.split(key)

    x = jax.random.normal(k_x, (BATCH, SEQ_LEN, INPUT_SIZE), jnp.float32)
    params = init_params(k_p)

    # Pack / transpose / bias-fold ONCE, outside the per-call path.
    param_slab = jax.block_until_ready(pack_params(*params))

    run = jax.jit(rnn_classifier)
    out = run(x, param_slab)
    out = jax.block_until_ready(out)

    ref = reference(x, *params)
    assert out.shape == (BATCH, NUM_CLASSES)
    assert jnp.allclose(out, ref, atol=1e-5, rtol=1e-5)

    print("KERNEL_OK")
</pallas_src>

<mosaic_0001>
module attributes {stable_mosaic.version = 11 : i64} {
  func.func @rnn_classifier_kernel(%arg0: memref<2x8x16xf32, #tpu.memory_space<vmem>>, %arg1: memref<96x32xf32, #tpu.memory_space<vmem>>, %arg2: memref<2x16xf32, #tpu.memory_space<vmem>>) attributes {dimension_semantics = [], scalar_prefetch = 0 : i64, scratch_operands = 0 : i64, tpu.core_type = #tpu.core_type<tc>} {
    %c0 = arith.constant 0 : index
    %c0_0 = arith.constant 0 : index
    %0 = vector.load %arg1[%c0, %c0_0] : memref<96x32xf32, #tpu.memory_space<vmem>>, vector<16x32xf32>
    %c16 = arith.constant 16 : index
    %c0_1 = arith.constant 0 : index
    %1 = vector.load %arg1[%c16, %c0_1] : memref<96x32xf32, #tpu.memory_space<vmem>>, vector<32x32xf32>
    %c48 = arith.constant 48 : index
    %c0_2 = arith.constant 0 : index
    %2 = vector.load %arg1[%c48, %c0_2] : memref<96x32xf32, #tpu.memory_space<vmem>>, vector<1x32xf32>
    %c56 = arith.constant 56 : index
    %c0_3 = arith.constant 0 : index
    %3 = vector.load %arg1[%c56, %c0_3] : memref<96x32xf32, #tpu.memory_space<vmem>>, vector<32x16xf32>
    %c88 = arith.constant 88 : index
    %c0_4 = arith.constant 0 : index
    %4 = vector.load %arg1[%c88, %c0_4] : memref<96x32xf32, #tpu.memory_space<vmem>>, vector<1x16xf32>
    %c0_5 = arith.constant 0 : index
    %c0_6 = arith.constant 0 : index
    %c0_7 = arith.constant 0 : index
    %5 = vector.load %arg0[%c0_5, %c0_6, %c0_7] : memref<2x8x16xf32, #tpu.memory_space<vmem>>, vector<2x8x16xf32>
    %6 = vector.shape_cast %5 : vector<2x8x16xf32> to vector<16x16xf32>
    %cst = arith.constant dense<0.000000e+00> : vector<16x32xf32>
    %7 = tpu.matmul %6, %0, %cst {dimension_numbers = #tpu.dot_dimension_numbers<[1], [0], [0], [1], [0, 0, 1, 1], [], []>} : vector<16x16xf32>, vector<16x32xf32>, vector<16x32xf32> -> vector<16x32xf32>
    %8 = vector.broadcast %2 : vector<1x32xf32> to vector<16x32xf32>
    %9 = arith.addf %7, %8 : vector<16x32xf32>
    %10 = vector.shape_cast %9 : vector<16x32xf32> to vector<2x8x32xf32>
    %cst_8 = arith.constant 0.000000e+00 : f32
    %11 = vector.broadcast %cst_8 : f32 to vector<2x32xf32>
    %12 = vector.extract_strided_slice %10 {offsets = [0, 0, 0], sizes = [2, 1, 32], strides = [1, 1, 1]} : vector<2x8x32xf32> to vector<2x1x32xf32>
    %13 = vector.shape_cast %12 : vector<2x1x32xf32> to vector<2x32xf32>
    %cst_9 = arith.constant dense<0.000000e+00> : vector<2x32xf32>
    %14 = tpu.matmul %11, %1, %cst_9 {dimension_numbers = #tpu.dot_dimension_numbers<[1], [0], [0], [1], [0, 0, 1, 1], [], []>} : vector<2x32xf32>, vector<32x32xf32>, vector<2x32xf32> -> vector<2x32xf32>
    %15 = arith.addf %13, %14 : vector<2x32xf32>
    %16 = math.tanh %15 : vector<2x32xf32>
    %17 = vector.extract_strided_slice %10 {offsets = [0, 1, 0], sizes = [2, 1, 32], strides = [1, 1, 1]} : vector<2x8x32xf32> to vector<2x1x32xf32>
    %18 = vector.shape_cast %17 : vector<2x1x32xf32> to vector<2x32xf32>
    %cst_10 = arith.constant dense<0.000000e+00> : vector<2x32xf32>
    %19 = tpu.matmul %16, %1, %cst_10 {dimension_numbers = #tpu.dot_dimension_numbers<[1], [0], [0], [1], [0, 0, 1, 1], [], []>} : vector<2x32xf32>, vector<32x32xf32>, vector<2x32xf32> -> vector<2x32xf32>
    %20 = arith.addf %18, %19 : vector<2x32xf32>
    %21 = math.tanh %20 : vector<2x32xf32>
    %22 = vector.extract_strided_slice %10 {offsets = [0, 2, 0], sizes = [2, 1, 32], strides = [1, 1, 1]} : vector<2x8x32xf32> to vector<2x1x32xf32>
    %23 = vector.shape_cast %22 : vector<2x1x32xf32> to vector<2x32xf32>
    %cst_11 = arith.constant dense<0.000000e+00> : vector<2x32xf32>
    %24 = tpu.matmul %21, %1, %cst_11 {dimension_numbers = #tpu.dot_dimension_numbers<[1], [0], [0], [1], [0, 0, 1, 1], [], []>} : vector<2x32xf32>, vector<32x32xf32>, vector<2x32xf32> -> vector<2x32xf32>
    %25 = arith.addf %23, %24 : vector<2x32xf32>
    %26 = math.tanh %25 : vector<2x32xf32>
    %27 = vector.extract_strided_slice %10 {offsets = [0, 3, 0], sizes = [2, 1, 32], strides = [1, 1, 1]} : vector<2x8x32xf32> to vector<2x1x32xf32>
    %28 = vector.shape_cast %27 : vector<2x1x32xf32> to vector<2x32xf32>
    %cst_12 = arith.constant dense<0.000000e+00> : vector<2x32xf32>
    %29 = tpu.matmul %26, %1, %cst_12 {dimension_numbers = #tpu.dot_dimension_numbers<[1], [0], [0], [1], [0, 0, 1, 1], [], []>} : vector<2x32xf32>, vector<32x32xf32>, vector<2x32xf32> -> vector<2x32xf32>
    %30 = arith.addf %28, %29 : vector<2x32xf32>
    %31 = math.tanh %30 : vector<2x32xf32>
    %32 = vector.extract_strided_slice %10 {offsets = [0, 4, 0], sizes = [2, 1, 32], strides = [1, 1, 1]} : vector<2x8x32xf32> to vector<2x1x32xf32>
    %33 = vector.shape_cast %32 : vector<2x1x32xf32> to vector<2x32xf32>
    %cst_13 = arith.constant dense<0.000000e+00> : vector<2x32xf32>
    %34 = tpu.matmul %31, %1, %cst_13 {dimension_numbers = #tpu.dot_dimension_numbers<[1], [0], [0], [1], [0, 0, 1, 1], [], []>} : vector<2x32xf32>, vector<32x32xf32>, vector<2x32xf32> -> vector<2x32xf32>
    %35 = arith.addf %33, %34 : vector<2x32xf32>
    %36 = math.tanh %35 : vector<2x32xf32>
    %37 = vector.extract_strided_slice %10 {offsets = [0, 5, 0], sizes = [2, 1, 32], strides = [1, 1, 1]} : vector<2x8x32xf32> to vector<2x1x32xf32>
    %38 = vector.shape_cast %37 : vector<2x1x32xf32> to vector<2x32xf32>
    %cst_14 = arith.constant dense<0.000000e+00> : vector<2x32xf32>
    %39 = tpu.matmul %36, %1, %cst_14 {dimension_numbers = #tpu.dot_dimension_numbers<[1], [0], [0], [1], [0, 0, 1, 1], [], []>} : vector<2x32xf32>, vector<32x32xf32>, vector<2x32xf32> -> vector<2x32xf32>
    %40 = arith.addf %38, %39 : vector<2x32xf32>
    %41 = math.tanh %40 : vector<2x32xf32>
    %42 = vector.extract_strided_slice %10 {offsets = [0, 6, 0], sizes = [2, 1, 32], strides = [1, 1, 1]} : vector<2x8x32xf32> to vector<2x1x32xf32>
    %43 = vector.shape_cast %42 : vector<2x1x32xf32> to vector<2x32xf32>
    %cst_15 = arith.constant dense<0.000000e+00> : vector<2x32xf32>
    %44 = tpu.matmul %41, %1, %cst_15 {dimension_numbers = #tpu.dot_dimension_numbers<[1], [0], [0], [1], [0, 0, 1, 1], [], []>} : vector<2x32xf32>, vector<32x32xf32>, vector<2x32xf32> -> vector<2x32xf32>
    %45 = arith.addf %43, %44 : vector<2x32xf32>
    %46 = math.tanh %45 : vector<2x32xf32>
    %47 = vector.extract_strided_slice %10 {offsets = [0, 7, 0], sizes = [2, 1, 32], strides = [1, 1, 1]} : vector<2x8x32xf32> to vector<2x1x32xf32>
    %48 = vector.shape_cast %47 : vector<2x1x32xf32> to vector<2x32xf32>
    %cst_16 = arith.constant dense<0.000000e+00> : vector<2x32xf32>
    %49 = tpu.matmul %46, %1, %cst_16 {dimension_numbers = #tpu.dot_dimension_numbers<[1], [0], [0], [1], [0, 0, 1, 1], [], []>} : vector<2x32xf32>, vector<32x32xf32>, vector<2x32xf32> -> vector<2x32xf32>
    %50 = arith.addf %48, %49 : vector<2x32xf32>
    %51 = math.tanh %50 : vector<2x32xf32>
    %cst_17 = arith.constant dense<0.000000e+00> : vector<2x16xf32>
    %52 = tpu.matmul %51, %3, %cst_17 {dimension_numbers = #tpu.dot_dimension_numbers<[1], [0], [0], [1], [0, 0, 1, 1], [], []>} : vector<2x32xf32>, vector<32x16xf32>, vector<2x16xf32> -> vector<2x16xf32>
    %53 = vector.broadcast %4 : vector<1x16xf32> to vector<2x16xf32>
    %54 = arith.addf %52, %53 : vector<2x16xf32>
    %c0_18 = arith.constant 0 : index
    %c0_19 = arith.constant 0 : index
    %55 = vector.load %arg2[%c0_18, %c0_19] : memref<2x16xf32, #tpu.memory_space<vmem>>, vector<2x16xf32>
    tpu.vector_store %arg2[%c0_18, %c0_19], %54 {strides = array<i32>} : memref<2x16xf32, #tpu.memory_space<vmem>>, vector<2x16xf32>,
    return
  }
}

</mosaic_0001>

<llo_original>
// kernel: rnn_classifier.1
$region0: #{rnn_classifier.1}
  #allocation0 [shape = 'u32[]', space=smem, size = 0x4, offset = 0x4, fixed_abs, tag = 'smem constant byte address 0x4 - core index']
  #allocation1 [shape = 'u32[144,128]{1,0:T(1,128)}', space=vmem, size = 0x12000, scoped, tag = 'internal scratch']
  %s0 = inlined_call_operand.vmem [shape: f32[2,8,16], index: 0, kind: input, shape index: {}]
  %s1 = inlined_call_operand.vmem [shape: f32[96,32], index: 1, kind: input, shape index: {}]
  %s2 = inlined_call_operand.hbm [shape: f32[2,16], index: 2, kind: output, shape index: {}]
  %s3 = sld [smem:[#allocation0]]
  $region18: #{rnn_classifier.1} parent=0
    _
  %s5 = ssub.s32 1, %s3
  %s6 = scalar_select 0, %s5, %s3
  $region1: #{rnn_classifier.1} parent=0
    #allocation2 [shape = 'u8[1024]{0}', space=vmem, size = 0x400, scoped, tag = 'output window, operand 0, single buffered']
    #allocation3 [shape = 's32[1]{0}', space=sflag, size = 0x4, scoped, tag = 'scoped memory for rnn_classifier.1']
    %7 = vsyncpa [#allocation3], 0
    // Predicated region
    $region2: #{rnn_classifier.1} parent=1 // pred_check
      _
    $region3: #{rnn_classifier.1} parent=1 // pred_check_branch
      %9 = sbr.rel (0) target = $region5
    $region4: #{rnn_classifier.1} parent=1 // pred_region
      _
    $region5: #{rnn_classifier.1} parent=1 // pred_fallthru
      _
    // Predicated region
    $region6: #{rnn_classifier.1} parent=1 // pred_check
      _
    $region7: #{rnn_classifier.1} parent=1 // pred_check_branch
      %11 = sbr.rel (0) target = $region9
    $region8: #{rnn_classifier.1} parent=1 // pred_region
      _
    $region9: #{rnn_classifier.1} parent=1 // pred_fallthru
      _
    %v12 = vld [vmem:[%s1] sm:$0xff]
    %v13 = vld [vmem:[%s1 + $0x8] sm:$0xff]
    %v14 = vld [vmem:[%s1 + $0x10] sm:$0xff]
    %v15 = vld [vmem:[%s1 + $0x18] sm:$0xff]
    %v16 = vld [vmem:[%s1 + $0x20] sm:$0xff]
    %v17 = vld [vmem:[%s1 + $0x28] sm:$0xff]
    %v18 = vld [vmem:[%s1 + $0x30] sm:$0x1]
    %v19 = vld [vmem:[%s1 + $0x38] sm:$0xff]
    %v20 = vld [vmem:[%s1 + $0x40] sm:$0xff]
    %v21 = vld [vmem:[%s1 + $0x48] sm:$0xff]
    %v22 = vld [vmem:[%s1 + $0x50] sm:$0xff]
    %v23 = vld [vmem:[%s1 + $0x58] sm:$0x1]
    %v24 = vld [vmem:[%s0] sm:$0xff]
    %v25 = vld [vmem:[%s0 + $0x8] sm:$0xff]
    %v26 = vlaneseq
    %v27 = vshrl.u32 %v26, 7
    %v28 = vsub.s32 0, %v27
    %v29 = vrot.slane %v18, %v28
    %vm30 = vcmask 130048
    %v32 = vsel %vm30, %v24, 0
    %v35 = vsel %vm30, %v25, 0
    %37 = vmatprep.subr.mxu0 0.0
    %38 = vmatpush1.msra.mxu0 %v12
    %39 = vmatprep.subr.mxu0 0.0
    %40 = vmatpush1.msra.mxu0 %v13
    %41 = vmatprep.subr.mxu0 0.0
    %42 = vmatpush1.msra.mxu0 0.0
    %43 = vmatprep.subr.mxu0 0.0
    %44 = vmatpush1.msra.mxu0 0.0
    %45 = vmatprep.subr.mxu0 0.0
    %46 = vmatpush1.msra.mxu0 0.0
    %47 = vmatprep.subr.mxu0 0.0
    %48 = vmatpush1.msra.mxu0 0.0
    %49 = vmatprep.subr.mxu0 0.0
    %50 = vmatpush1.msra.mxu0 0.0
    %51 = vmatprep.subr.mxu0 0.0
    %52 = vmatpush1.msra.mxu0 0.0
    %53 = vmatprep.subr.mxu0 0.0
    %54 = vmatpush1.msra.mxu0 0.0
    %55 = vmatprep.subr.mxu0 0.0
    %56 = vmatpush1.msra.mxu0 0.0
    %57 = vmatprep.subr.mxu0 0.0
    %58 = vmatpush1.msra.mxu0 0.0
    %59 = vmatprep.subr.mxu0 0.0
    %60 = vmatpush1.msra.mxu0 0.0
    %61 = vmatprep.subr.mxu0 0.0
    %62 = vmatpush1.msra.mxu0 0.0
    %63 = vmatprep.subr.mxu0 0.0
    %64 = vmatpush1.msra.mxu0 0.0
    %65 = vmatprep.subr.mxu0 0.0
    %66 = vmatpush1.msra.mxu0 0.0
    %67 = vmatprep.subr.mxu0 0.0
    %68 = vmatpush1.msra.mxu0 0.0
    %69 = vmatprep.subr.mxu0 0.0
    %70 = vmatpush1.msra.mxu0 0.0
    %71 = vmatprep.subr.mxu0 0.0
    %72 = vmatpush1.msra.mxu0 0.0
    %73 = vmatprep.subr.mxu0 0.0
    %74 = vmatpush1.msra.mxu0 0.0
    %75 = vmatprep.subr.mxu0 0.0
    %76 = vmatpush1.msra.mxu0 0.0
    %77 = vmatprep.subr.mxu0 0.0
    %78 = vmatpush1.msra.mxu0 0.0
    %79 = vmatprep.subr.mxu0 0.0
    %80 = vmatpush1.msra.mxu0 0.0
    %81 = vmatprep.subr.mxu0 0.0
    %82 = vmatpush1.msra.mxu0 0.0
    %83 = vmatprep.subr.mxu0 0.0
    %84 = vmatpush1.msra.mxu0 0.0
    %85 = vmatprep.subr.mxu0 0.0
    %86 = vmatpush1.msra.mxu0 0.0
    %87 = vmatprep.subr.mxu0 0.0
    %88 = vmatpush1.msra.mxu0 0.0
    %89 = vmatprep.subr.mxu0 0.0
    %90 = vmatpush1.msra.mxu0 0.0
    %91 = vmatprep.subr.mxu0 0.0
    %92 = vmatpush1.msra.mxu0 0.0
    %93 = vmatprep.subr.mxu0 0.0
    %94 = vmatpush1.msra.mxu0 0.0
    %95 = vmatprep.subr.mxu0 0.0
    %96 = vmatpush1.msra.mxu0 0.0
    %97 = vmatprep.subr.mxu0 0.0
    %98 = vmatpush1.msra.mxu0 0.0
    %99 = vmatprep.subr.mxu0 0.0
    %100 = vmatpush1.msra.mxu0 0.0
    %101 = vmatprep.mubr.f32.mxu0 0.0
    %102 = vmatmul.mubr.f32.gmra.mrb[0].mxu0 %v32
    %v103 = vpop.f32.mrb[0].mxu0
    %v104 = vadd.f32 %v29, %v103
    %v105 = vpop.f32.mrb[0].mxu0
    %106 = vmatprep.mubr.f32.mxu0 0.0
    %107 = vmatmul.mubr.f32.gmra.mrb[0].mxu0 %v35
    %v108 = vpop.f32.mrb[0].mxu0
    %v109 = vadd.f32 %v29, %v108
    %v110 = vpop.f32.mrb[0].mxu0
    %111 = vdwg.mxu0
    %vm112 = vcmask 261120
    %v114 = vsel %vm112, 0.0, 0
    %116 = vmatprep.subr.mxu0 0.0
    %117 = vmatpush1.msra.mxu0 %v14
    %118 = vmatprep.subr.mxu0 0.0
    %119 = vmatpush1.msra.mxu0 %v15
    %120 = vmatprep.subr.mxu0 0.0
    %121 = vmatpush1.msra.mxu0 %v16
    %122 = vmatprep.subr.mxu0 0.0
    %123 = vmatpush1.msra.mxu0 %v17
    %124 = vmatprep.subr.mxu0 0.0
    %125 = vmatpush1.msra.mxu0 0.0
    %126 = vmatprep.subr.mxu0 0.0
    %127 = vmatpush1.msra.mxu0 0.0
    %128 = vmatprep.subr.mxu0 0.0
    %129 = vmatpush1.msra.mxu0 0.0
    %130 = vmatprep.subr.mxu0 0.0
    %131 = vmatpush1.msra.mxu0 0.0
    %132 = vmatprep.subr.mxu0 0.0
    %133 = vmatpush1.msra.mxu0 0.0
    %134 = vmatprep.subr.mxu0 0.0
    %135 = vmatpush1.msra.mxu0 0.0
    %136 = vmatprep.subr.mxu0 0.0
    %137 = vmatpush1.msra.mxu0 0.0
    %138 = vmatprep.subr.mxu0 0.0
    %139 = vmatpush1.msra.mxu0 0.0
    %140 = vmatprep.subr.mxu0 0.0
    %141 = vmatpush1.msra.mxu0 0.0
    %142 = vmatprep.subr.mxu0 0.0
    %143 = vmatpush1.msra.mxu0 0.0
    %144 = vmatprep.subr.mxu0 0.0
    %145 = vmatpush1.msra.mxu0 0.0
    %146 = vmatprep.subr.mxu0 0.0
    %147 = vmatpush1.msra.mxu0 0.0
    %148 = vmatprep.subr.mxu0 0.0
    %149 = vmatpush1.msra.mxu0 0.0
    %150 = vmatprep.subr.mxu0 0.0
    %151 = vmatpush1.msra.mxu0 0.0
    %152 = vmatprep.subr.mxu0 0.0
    %153 = vmatpush1.msra.mxu0 0.0
    %154 = vmatprep.subr.mxu0 0.0
    %155 = vmatpush1.msra.mxu0 0.0
    %156 = vmatprep.subr.mxu0 0.0
    %157 = vmatpush1.msra.mxu0 0.0
    %158 = vmatprep.subr.mxu0 0.0
    %159 = vmatpush1.msra.mxu0 0.0
    %160 = vmatprep.subr.mxu0 0.0
    %161 = vmatpush1.msra.mxu0 0.0
    %162 = vmatprep.subr.mxu0 0.0
    %163 = vmatpush1.msra.mxu0 0.0
    %164 = vmatprep.subr.mxu0 0.0
    %165 = vmatpush1.msra.mxu0 0.0
    %166 = vmatprep.subr.mxu0 0.0
    %167 = vmatpush1.msra.mxu0 0.0
    %168 = vmatprep.subr.mxu0 0.0
    %169 = vmatpush1.msra.mxu0 0.0
    %170 = vmatprep.subr.mxu0 0.0
    %171 = vmatpush1.msra.mxu0 0.0
    %172 = vmatprep.subr.mxu0 0.0
    %173 = vmatpush1.msra.mxu0 0.0
    %174 = vmatprep.subr.mxu0 0.0
    %175 = vmatpush1.msra.mxu0 0.0
    %176 = vmatprep.subr.mxu0 0.0
    %177 = vmatpush1.msra.mxu0 0.0
    %178 = vmatprep.subr.mxu0 0.0
    %179 = vmatpush1.msra.mxu0 0.0
    %180 = vmatprep.mubr.f32.mxu0 0.0
    %181 = vmatmul.mubr.f32.gmra.mrb[0].mxu0 %v114
    %v182 = vpop.f32.mrb[0].mxu0
    %v183 = vadd.f32 0.0, %v182
    %v184 = vpop.f32.mrb[0].mxu0
    %185 = vdwg.mxu0
    %v187 = vrot.slane %v183, 1
    %v190 = vadd.f32 %v104, %v183
    %v191 = vadd.f32 %v109, %v187
    %v192 = vtanh.pop %v190
    %v193 = vtanh.pop %v191
    %v196 = vrot.slane %v193, 7
    %vm197 = vcmask 1041409
    %v198 = vsel %vm197, %v196, %v192
    %v199 = vsel %vm112, %v198, 0
    %201 = vmatprep.subr.mxu0 0.0
    %202 = vmatpush1.msra.mxu0 %v14
    %203 = vmatprep.subr.mxu0 0.0
    %204 = vmatpush1.msra.mxu0 %v15
    %205 = vmatprep.subr.mxu0 0.0
    %206 = vmatpush1.msra.mxu0 %v16
    %207 = vmatprep.subr.mxu0 0.0
    %208 = vmatpush1.msra.mxu0 %v17
    %209 = vmatprep.subr.mxu0 0.0
    %210 = vmatpush1.msra.mxu0 0.0
    %211 = vmatprep.subr.mxu0 0.0
    %212 = vmatpush1.msra.mxu0 0.0
    %213 = vmatprep.subr.mxu0 0.0
    %214 = vmatpush1.msra.mxu0 0.0
    %215 = vmatprep.subr.mxu0 0.0
    %216 = vmatpush1.msra.mxu0 0.0
    %217 = vmatprep.subr.mxu0 0.0
    %218 = vmatpush1.msra.mxu0 0.0
    %219 = vmatprep.subr.mxu0 0.0
    %220 = vmatpush1.msra.mxu0 0.0
    %221 = vmatprep.subr.mxu0 0.0
    %222 = vmatpush1.msra.mxu0 0.0
    %223 = vmatprep.subr.mxu0 0.0
    %224 = vmatpush1.msra.mxu0 0.0
    %225 = vmatprep.subr.mxu0 0.0
    %226 = vmatpush1.msra.mxu0 0.0
    %227 = vmatprep.subr.mxu0 0.0
    %228 = vmatpush1.msra.mxu0 0.0
    %229 = vmatprep.subr.mxu0 0.0
    %230 = vmatpush1.msra.mxu0 0.0
    %231 = vmatprep.subr.mxu0 0.0
    %232 = vmatpush1.msra.mxu0 0.0
    %233 = vmatprep.subr.mxu0 0.0
    %234 = vmatpush1.msra.mxu0 0.0
    %235 = vmatprep.subr.mxu0 0.0
    %236 = vmatpush1.msra.mxu0 0.0
    %237 = vmatprep.subr.mxu0 0.0
    %238 = vmatpush1.msra.mxu0 0.0
    %239 = vmatprep.subr.mxu0 0.0
    %240 = vmatpush1.msra.mxu0 0.0
    %241 = vmatprep.subr.mxu0 0.0
    %242 = vmatpush1.msra.mxu0 0.0
    %243 = vmatprep.subr.mxu0 0.0
    %244 = vmatpush1.msra.mxu0 0.0
    %245 = vmatprep.subr.mxu0 0.0
    %246 = vmatpush1.msra.mxu0 0.0
    %247 = vmatprep.subr.mxu0 0.0
    %248 = vmatpush1.msra.mxu0 0.0
    %249 = vmatprep.subr.mxu0 0.0
    %250 = vmatpush1.msra.mxu0 0.0
    %251 = vmatprep.subr.mxu0 0.0
    %252 = vmatpush1.msra.mxu0 0.0
    %253 = vmatprep.subr.mxu0 0.0
    %254 = vmatpush1.msra.mxu0 0.0
    %255 = vmatprep.subr.mxu0 0.0
    %256 = vmatpush1.msra.mxu0 0.0
    %257 = vmatprep.subr.mxu0 0.0
    %258 = vmatpush1.msra.mxu0 0.0
    %259 = vmatprep.subr.mxu0 0.0
    %260 = vmatpush1.msra.mxu0 0.0
    %261 = vmatprep.subr.mxu0 0.0
    %262 = vmatpush1.msra.mxu0 0.0
    %263 = vmatprep.subr.mxu0 0.0
    %264 = vmatpush1.msra.mxu0 0.0
    %265 = vmatprep.mubr.f32.mxu0 0.0
    %266 = vmatmul.mubr.f32.gmra.mrb[0].mxu0 %v199
    %v267 = vpop.f32.mrb[0].mxu0
    %v268 = vadd.f32 0.0, %v267
    %v269 = vpop.f32.mrb[0].mxu0
    %270 = vdwg.mxu0
    %v272 = vrot.slane %v268, 7
    %v275 = vadd.f32 %v104, %v272
    %v276 = vadd.f32 %v109, %v268
    %v277 = vtanh.pop %v275
    %v278 = vtanh.pop %v276
    %v281 = vrot.slane %v277, 1
    %v282 = vsel %vm197, %v278, %v281
    %v283 = vsel %vm112, %v282, 0
    %285 = vmatprep.subr.mxu0 0.0
    %286 = vmatpush1.msra.mxu0 %v14
    %287 = vmatprep.subr.mxu0 0.0
    %288 = vmatpush1.msra.mxu0 %v15
    %289 = vmatprep.subr.mxu0 0.0
    %290 = vmatpush1.msra.mxu0 %v16
    %291 = vmatprep.subr.mxu0 0.0
    %292 = vmatpush1.msra.mxu0 %v17
    %293 = vmatprep.subr.mxu0 0.0
    %294 = vmatpush1.msra.mxu0 0.0
    %295 = vmatprep.subr.mxu0 0.0
    %296 = vmatpush1.msra.mxu0 0.0
    %297 = vmatprep.subr.mxu0 0.0
    %298 = vmatpush1.msra.mxu0 0.0
    %299 = vmatprep.subr.mxu0 0.0
    %300 = vmatpush1.msra.mxu0 0.0
    %301 = vmatprep.subr.mxu0 0.0
    %302 = vmatpush1.msra.mxu0 0.0
    %303 = vmatprep.subr.mxu0 0.0
    %304 = vmatpush1.msra.mxu0 0.0
    %305 = vmatprep.subr.mxu0 0.0
    %306 = vmatpush1.msra.mxu0 0.0
    %307 = vmatprep.subr.mxu0 0.0
    %308 = vmatpush1.msra.mxu0 0.0
    %309 = vmatprep.subr.mxu0 0.0
    %310 = vmatpush1.msra.mxu0 0.0
    %311 = vmatprep.subr.mxu0 0.0
    %312 = vmatpush1.msra.mxu0 0.0
    %313 = vmatprep.subr.mxu0 0.0
    %314 = vmatpush1.msra.mxu0 0.0
    %315 = vmatprep.subr.mxu0 0.0
    %316 = vmatpush1.msra.mxu0 0.0
    %317 = vmatprep.subr.mxu0 0.0
    %318 = vmatpush1.msra.mxu0 0.0
    %319 = vmatprep.subr.mxu0 0.0
    %320 = vmatpush1.msra.mxu0 0.0
    %321 = vmatprep.subr.mxu0 0.0
    %322 = vmatpush1.msra.mxu0 0.0
    %323 = vmatprep.subr.mxu0 0.0
    %324 = vmatpush1.msra.mxu0 0.0
    %325 = vmatprep.subr.mxu0 0.0
    %326 = vmatpush1.msra.mxu0 0.0
    %327 = vmatprep.subr.mxu0 0.0
    %328 = vmatpush1.msra.mxu0 0.0
    %329 = vmatprep.subr.mxu0 0.0
    %330 = vmatpush1.msra.mxu0 0.0
    %331 = vmatprep.subr.mxu0 0.0
    %332 = vmatpush1.msra.mxu0 0.0
    %333 = vmatprep.subr.mxu0 0.0
    %334 = vmatpush1.msra.mxu0 0.0
    %335 = vmatprep.subr.mxu0 0.0
    %336 = vmatpush1.msra.mxu0 0.0
    %337 = vmatprep.subr.mxu0 0.0
    %338 = vmatpush1.msra.mxu0 0.0
    %339 = vmatprep.subr.mxu0 0.0
    %340 = vmatpush1.msra.mxu0 0.0
    %341 = vmatprep.subr.mxu0 0.0
    %342 = vmatpush1.msra.mxu0 0.0
    %343 = vmatprep.subr.mxu0 0.0
    %344 = vmatpush1.msra.mxu0 0.0
    %345 = vmatprep.subr.mxu0 0.0
    %346 = vmatpush1.msra.mxu0 0.0
    %347 = vmatprep.subr.mxu0 0.0
    %348 = vmatpush1.msra.mxu0 0.0
    %349 = vmatprep.mubr.f32.mxu0 0.0
    %350 = vmatmul.mubr.f32.gmra.mrb[0].mxu0 %v283
    %v351 = vpop.f32.mrb[0].mxu0
    %v352 = vadd.f32 0.0, %v351
    %v353 = vpop.f32.mrb[0].mxu0
    %354 = vdwg.mxu0
    %v356 = vrot.slane %v352, 6
    %v357 = vrot.slane %v352, 7
    %v360 = vadd.f32 %v104, %v356
    %v361 = vadd.f32 %v109, %v357
    %v362 = vtanh.pop %v360
    %v363 = vtanh.pop %v361
    %v366 = vrot.slane %v362, 2
    %v367 = vrot.slane %v363, 1
    %v368 = vsel %vm197, %v367, %v366
    %v369 = vsel %vm112, %v368, 0
    %371 = vmatprep.subr.mxu0 0.0
    %372 = vmatpush1.msra.mxu0 %v14
    %373 = vmatprep.subr.mxu0 0.0
    %374 = vmatpush1.msra.mxu0 %v15
    %375 = vmatprep.subr.mxu0 0.0
    %376 = vmatpush1.msra.mxu0 %v16
    %377 = vmatprep.subr.mxu0 0.0
    %378 = vmatpush1.msra.mxu0 %v17
    %379 = vmatprep.subr.mxu0 0.0
    %380 = vmatpush1.msra.mxu0 0.0
    %381 = vmatprep.subr.mxu0 0.0
    %382 = vmatpush1.msra.mxu0 0.0
    %383 = vmatprep.subr.mxu0 0.0
    %384 = vmatpush1.msra.mxu0 0.0
    %385 = vmatprep.subr.mxu0 0.0
    %386 = vmatpush1.msra.mxu0 0.0
    %387 = vmatprep.subr.mxu0 0.0
    %388 = vmatpush1.msra.mxu0 0.0
    %389 = vmatprep.subr.mxu0 0.0
    %390 = vmatpush1.msra.mxu0 0.0
    %391 = vmatprep.subr.mxu0 0.0
    %392 = vmatpush1.msra.mxu0 0.0
    %393 = vmatprep.subr.mxu0 0.0
    %394 = vmatpush1.msra.mxu0 0.0
    %395 = vmatprep.subr.mxu0 0.0
    %396 = vmatpush1.msra.mxu0 0.0
    %397 = vmatprep.subr.mxu0 0.0
    %398 = vmatpush1.msra.mxu0 0.0
    %399 = vmatprep.subr.mxu0 0.0
    %400 = vmatpush1.msra.mxu0 0.0
    %401 = vmatprep.subr.mxu0 0.0
    %402 = vmatpush1.msra.mxu0 0.0
    %403 = vmatprep.subr.mxu0 0.0
    %404 = vmatpush1.msra.mxu0 0.0
    %405 = vmatprep.subr.mxu0 0.0
    %406 = vmatpush1.msra.mxu0 0.0
    %407 = vmatprep.subr.mxu0 0.0
    %408 = vmatpush1.msra.mxu0 0.0
    %409 = vmatprep.subr.mxu0 0.0
    %410 = vmatpush1.msra.mxu0 0.0
    %411 = vmatprep.subr.mxu0 0.0
    %412 = vmatpush1.msra.mxu0 0.0
    %413 = vmatprep.subr.mxu0 0.0
    %414 = vmatpush1.msra.mxu0 0.0
    %415 = vmatprep.subr.mxu0 0.0
    %416 = vmatpush1.msra.mxu0 0.0
    %417 = vmatprep.subr.mxu0 0.0
    %418 = vmatpush1.msra.mxu0 0.0
    %419 = vmatprep.subr.mxu0 0.0
    %420 = vmatpush1.msra.mxu0 0.0
    %421 = vmatprep.subr.mxu0 0.0
    %422 = vmatpush1.msra.mxu0 0.0
    %423 = vmatprep.subr.mxu0 0.0
    %424 = vmatpush1.msra.mxu0 0.0
    %425 = vmatprep.subr.mxu0 0.0
    %426 = vmatpush1.msra.mxu0 0.0
    %427 = vmatprep.subr.mxu0 0.0
    %428 = vmatpush1.msra.mxu0 0.0
    %429 = vmatprep.subr.mxu0 0.0
    %430 = vmatpush1.msra.mxu0 0.0
    %431 = vmatprep.subr.mxu0 0.0
    %432 = vmatpush1.msra.mxu0 0.0
    %433 = vmatprep.subr.mxu0 0.0
    %434 = vmatpush1.msra.mxu0 0.0
    %435 = vmatprep.mubr.f32.mxu0 0.0
    %436 = vmatmul.mubr.f32.gmra.mrb[0].mxu0 %v369
    %v437 = vpop.f32.mrb[0].mxu0
    %v438 = vadd.f32 0.0, %v437
    %v439 = vpop.f32.mrb[0].mxu0
    %440 = vdwg.mxu0
    %v442 = vrot.slane %v438, 5
    %v443 = vrot.slane %v438, 6
    %v446 = vadd.f32 %v104, %v442
    %v447 = vadd.f32 %v109, %v443
    %v448 = vtanh.pop %v446
    %v449 = vtanh.pop %v447
    %v452 = vrot.slane %v448, 3
    %v453 = vrot.slane %v449, 2
    %v454 = vsel %vm197, %v453, %v452
    %v455 = vsel %vm112, %v454, 0
    %457 = vmatprep.subr.mxu0 0.0
    %458 = vmatpush1.msra.mxu0 %v14
    %459 = vmatprep.subr.mxu0 0.0
    %460 = vmatpush1.msra.mxu0 %v15
    %461 = vmatprep.subr.mxu0 0.0
    %462 = vmatpush1.msra.mxu0 %v16
    %463 = vmatprep.subr.mxu0 0.0
    %464 = vmatpush1.msra.mxu0 %v17
    %465 = vmatprep.subr.mxu0 0.0
    %466 = vmatpush1.msra.mxu0 0.0
    %467 = vmatprep.subr.mxu0 0.0
    %468 = vmatpush1.msra.mxu0 0.0
    %469 = vmatprep.subr.mxu0 0.0
    %470 = vmatpush1.msra.mxu0 0.0
    %471 = vmatprep.subr.mxu0 0.0
    %472 = vmatpush1.msra.mxu0 0.0
    %473 = vmatprep.subr.mxu0 0.0
    %474 = vmatpush1.msra.mxu0 0.0
    %475 = vmatprep.subr.mxu0 0.0
    %476 = vmatpush1.msra.mxu0 0.0
    %477 = vmatprep.subr.mxu0 0.0
    %478 = vmatpush1.msra.mxu0 0.0
    %479 = vmatprep.subr.mxu0 0.0
    %480 = vmatpush1.msra.mxu0 0.0
    %481 = vmatprep.subr.mxu0 0.0
    %482 = vmatpush1.msra.mxu0 0.0
    %483 = vmatprep.subr.mxu0 0.0
    %484 = vmatpush1.msra.mxu0 0.0
    %485 = vmatprep.subr.mxu0 0.0
    %486 = vmatpush1.msra.mxu0 0.0
    %487 = vmatprep.subr.mxu0 0.0
    %488 = vmatpush1.msra.mxu0 0.0
    %489 = vmatprep.subr.mxu0 0.0
    %490 = vmatpush1.msra.mxu0 0.0
    %491 = vmatprep.subr.mxu0 0.0
    %492 = vmatpush1.msra.mxu0 0.0
    %493 = vmatprep.subr.mxu0 0.0
    %494 = vmatpush1.msra.mxu0 0.0
    %495 = vmatprep.subr.mxu0 0.0
    %496 = vmatpush1.msra.mxu0 0.0
    %497 = vmatprep.subr.mxu0 0.0
    %498 = vmatpush1.msra.mxu0 0.0
    %499 = vmatprep.subr.mxu0 0.0
    %500 = vmatpush1.msra.mxu0 0.0
    %501 = vmatprep.subr.mxu0 0.0
    %502 = vmatpush1.msra.mxu0 0.0
    %503 = vmatprep.subr.mxu0 0.0
    %504 = vmatpush1.msra.mxu0 0.0
    %505 = vmatprep.subr.mxu0 0.0
    %506 = vmatpush1.msra.mxu0 0.0
    %507 = vmatprep.subr.mxu0 0.0
    %508 = vmatpush1.msra.mxu0 0.0
    %509 = vmatprep.subr.mxu0 0.0
    %510 = vmatpush1.msra.mxu0 0.0
    %511 = vmatprep.subr.mxu0 0.0
    %512 = vmatpush1.msra.mxu0 0.0
    %513 = vmatprep.subr.mxu0 0.0
    %514 = vmatpush1.msra.mxu0 0.0
    %515 = vmatprep.subr.mxu0 0.0
    %516 = vmatpush1.msra.mxu0 0.0
    %517 = vmatprep.subr.mxu0 0.0
    %518 = vmatpush1.msra.mxu0 0.0
    %519 = vmatprep.subr.mxu0 0.0
    %520 = vmatpush1.msra.mxu0 0.0
    %521 = vmatprep.mubr.f32.mxu0 0.0
    %522 = vmatmul.mubr.f32.gmra.mrb[0].mxu0 %v455
    %v523 = vpop.f32.mrb[0].mxu0
    %v524 = vadd.f32 0.0, %v523
    %v525 = vpop.f32.mrb[0].mxu0
    %526 = vdwg.mxu0
    %v528 = vrot.slane %v524, 4
    %v529 = vrot.slane %v524, 5
    %v532 = vadd.f32 %v104, %v528
    %v533 = vadd.f32 %v109, %v529
    %v534 = vtanh.pop %v532
    %v535 = vtanh.pop %v533
    %v538 = vrot.slane %v534, 4
    %v539 = vrot.slane %v535, 3
    %v540 = vsel %vm197, %v539, %v538
    %v541 = vsel %vm112, %v540, 0
    %543 = vmatprep.subr.mxu0 0.0
    %544 = vmatpush1.msra.mxu0 %v14
    %545 = vmatprep.subr.mxu0 0.0
    %546 = vmatpush1.msra.mxu0 %v15
    %547 = vmatprep.subr.mxu0 0.0
    %548 = vmatpush1.msra.mxu0 %v16
    %549 = vmatprep.subr.mxu0 0.0
    %550 = vmatpush1.msra.mxu0 %v17
    %551 = vmatprep.subr.mxu0 0.0
    %552 = vmatpush1.msra.mxu0 0.0
    %553 = vmatprep.subr.mxu0 0.0
    %554 = vmatpush1.msra.mxu0 0.0
    %555 = vmatprep.subr.mxu0 0.0
    %556 = vmatpush1.msra.mxu0 0.0
    %557 = vmatprep.subr.mxu0 0.0
    %558 = vmatpush1.msra.mxu0 0.0
    %559 = vmatprep.subr.mxu0 0.0
    %560 = vmatpush1.msra.mxu0 0.0
    %561 = vmatprep.subr.mxu0 0.0
    %562 = vmatpush1.msra.mxu0 0.0
    %563 = vmatprep.subr.mxu0 0.0
    %564 = vmatpush1.msra.mxu0 0.0
    %565 = vmatprep.subr.mxu0 0.0
    %566 = vmatpush1.msra.mxu0 0.0
    %567 = vmatprep.subr.mxu0 0.0
    %568 = vmatpush1.msra.mxu0 0.0
    %569 = vmatprep.subr.mxu0 0.0
    %570 = vmatpush1.msra.mxu0 0.0
    %571 = vmatprep.subr.mxu0 0.0
    %572 = vmatpush1.msra.mxu0 0.0
    %573 = vmatprep.subr.mxu0 0.0
    %574 = vmatpush1.msra.mxu0 0.0
    %575 = vmatprep.subr.mxu0 0.0
    %576 = vmatpush1.msra.mxu0 0.0
    %577 = vmatprep.subr.mxu0 0.0
    %578 = vmatpush1.msra.mxu0 0.0
    %579 = vmatprep.subr.mxu0 0.0
    %580 = vmatpush1.msra.mxu0 0.0
    %581 = vmatprep.subr.mxu0 0.0
    %582 = vmatpush1.msra.mxu0 0.0
    %583 = vmatprep.subr.mxu0 0.0
    %584 = vmatpush1.msra.mxu0 0.0
    %585 = vmatprep.subr.mxu0 0.0
    %586 = vmatpush1.msra.mxu0 0.0
    %587 = vmatprep.subr.mxu0 0.0
    %588 = vmatpush1.msra.mxu0 0.0
    %589 = vmatprep.subr.mxu0 0.0
    %590 = vmatpush1.msra.mxu0 0.0
    %591 = vmatprep.subr.mxu0 0.0
    %592 = vmatpush1.msra.mxu0 0.0
    %593 = vmatprep.subr.mxu0 0.0
    %594 = vmatpush1.msra.mxu0 0.0
    %595 = vmatprep.subr.mxu0 0.0
    %596 = vmatpush1.msra.mxu0 0.0
    %597 = vmatprep.subr.mxu0 0.0
    %598 = vmatpush1.msra.mxu0 0.0
    %599 = vmatprep.subr.mxu0 0.0
    %600 = vmatpush1.msra.mxu0 0.0
    %601 = vmatprep.subr.mxu0 0.0
    %602 = vmatpush1.msra.mxu0 0.0
    %603 = vmatprep.subr.mxu0 0.0
    %604 = vmatpush1.msra.mxu0 0.0
    %605 = vmatprep.subr.mxu0 0.0
    %606 = vmatpush1.msra.mxu0 0.0
    %607 = vmatprep.mubr.f32.mxu0 0.0
    %608 = vmatmul.mubr.f32.gmra.mrb[0].mxu0 %v541
    %v609 = vpop.f32.mrb[0].mxu0
    %v610 = vadd.f32 0.0, %v609
    %v611 = vpop.f32.mrb[0].mxu0
    %612 = vdwg.mxu0
    %v614 = vrot.slane %v610, 3
    %v615 = vrot.slane %v610, 4
    %v618 = vadd.f32 %v104, %v614
    %v619 = vadd.f32 %v109, %v615
    %v620 = vtanh.pop %v618
    %v621 = vtanh.pop %v619
    %v624 = vrot.slane %v620, 5
    %v625 = vrot.slane %v621, 4
    %v626 = vsel %vm197, %v625, %v624
    %v627 = vsel %vm112, %v626, 0
    %629 = vmatprep.subr.mxu0 0.0
    %630 = vmatpush1.msra.mxu0 %v14
    %631 = vmatprep.subr.mxu0 0.0
    %632 = vmatpush1.msra.mxu0 %v15
    %633 = vmatprep.subr.mxu0 0.0
    %634 = vmatpush1.msra.mxu0 %v16
    %635 = vmatprep.subr.mxu0 0.0
    %636 = vmatpush1.msra.mxu0 %v17
    %637 = vmatprep.subr.mxu0 0.0
    %638 = vmatpush1.msra.mxu0 0.0
    %639 = vmatprep.subr.mxu0 0.0
    %640 = vmatpush1.msra.mxu0 0.0
    %641 = vmatprep.subr.mxu0 0.0
    %642 = vmatpush1.msra.mxu0 0.0
    %643 = vmatprep.subr.mxu0 0.0
    %644 = vmatpush1.msra.mxu0 0.0
    %645 = vmatprep.subr.mxu0 0.0
    %646 = vmatpush1.msra.mxu0 0.0
    %647 = vmatprep.subr.mxu0 0.0
    %648 = vmatpush1.msra.mxu0 0.0
    %649 = vmatprep.subr.mxu0 0.0
    %650 = vmatpush1.msra.mxu0 0.0
    %651 = vmatprep.subr.mxu0 0.0
    %652 = vmatpush1.msra.mxu0 0.0
    %653 = vmatprep.subr.mxu0 0.0
    %654 = vmatpush1.msra.mxu0 0.0
    %655 = vmatprep.subr.mxu0 0.0
    %656 = vmatpush1.msra.mxu0 0.0
    %657 = vmatprep.subr.mxu0 0.0
    %658 = vmatpush1.msra.mxu0 0.0
    %659 = vmatprep.subr.mxu0 0.0
    %660 = vmatpush1.msra.mxu0 0.0
    %661 = vmatprep.subr.mxu0 0.0
    %662 = vmatpush1.msra.mxu0 0.0
    %663 = vmatprep.subr.mxu0 0.0
    %664 = vmatpush1.msra.mxu0 0.0
    %665 = vmatprep.subr.mxu0 0.0
    %666 = vmatpush1.msra.mxu0 0.0
    %667 = vmatprep.subr.mxu0 0.0
    %668 = vmatpush1.msra.mxu0 0.0
    %669 = vmatprep.subr.mxu0 0.0
    %670 = vmatpush1.msra.mxu0 0.0
    %671 = vmatprep.subr.mxu0 0.0
    %672 = vmatpush1.msra.mxu0 0.0
    %673 = vmatprep.subr.mxu0 0.0
    %674 = vmatpush1.msra.mxu0 0.0
    %675 = vmatprep.subr.mxu0 0.0
    %676 = vmatpush1.msra.mxu0 0.0
    %677 = vmatprep.subr.mxu0 0.0
    %678 = vmatpush1.msra.mxu0 0.0
    %679 = vmatprep.subr.mxu0 0.0
    %680 = vmatpush1.msra.mxu0 0.0
    %681 = vmatprep.subr.mxu0 0.0
    %682 = vmatpush1.msra.mxu0 0.0
    %683 = vmatprep.subr.mxu0 0.0
    %684 = vmatpush1.msra.mxu0 0.0
    %685 = vmatprep.subr.mxu0 0.0
    %686 = vmatpush1.msra.mxu0 0.0
    %687 = vmatprep.subr.mxu0 0.0
    %688 = vmatpush1.msra.mxu0 0.0
    %689 = vmatprep.subr.mxu0 0.0
    %690 = vmatpush1.msra.mxu0 0.0
    %691 = vmatprep.subr.mxu0 0.0
    %692 = vmatpush1.msra.mxu0 0.0
    %693 = vmatprep.mubr.f32.mxu0 0.0
    %694 = vmatmul.mubr.f32.gmra.mrb[0].mxu0 %v627
    %v695 = vpop.f32.mrb[0].mxu0
    %v696 = vadd.f32 0.0, %v695
    %v697 = vpop.f32.mrb[0].mxu0
    %698 = vdwg.mxu0
    %v700 = vrot.slane %v696, 2
    %v701 = vrot.slane %v696, 3
    %v704 = vadd.f32 %v104, %v700
    %v705 = vadd.f32 %v109, %v701
    %v706 = vtanh.pop %v704
    %v707 = vtanh.pop %v705
    %v710 = vrot.slane %v706, 6
    %v711 = vrot.slane %v707, 5
    %v712 = vsel %vm197, %v711, %v710
    %v713 = vsel %vm112, %v712, 0
    %715 = vmatprep.subr.mxu0 0.0
    %716 = vmatpush1.msra.mxu0 %v14
    %717 = vmatprep.subr.mxu0 0.0
    %718 = vmatpush1.msra.mxu0 %v15
    %719 = vmatprep.subr.mxu0 0.0
    %720 = vmatpush1.msra.mxu0 %v16
    %721 = vmatprep.subr.mxu0 0.0
    %722 = vmatpush1.msra.mxu0 %v17
    %723 = vmatprep.subr.mxu0 0.0
    %724 = vmatpush1.msra.mxu0 0.0
    %725 = vmatprep.subr.mxu0 0.0
    %726 = vmatpush1.msra.mxu0 0.0
    %727 = vmatprep.subr.mxu0 0.0
    %728 = vmatpush1.msra.mxu0 0.0
    %729 = vmatprep.subr.mxu0 0.0
    %730 = vmatpush1.msra.mxu0 0.0
    %731 = vmatprep.subr.mxu0 0.0
    %732 = vmatpush1.msra.mxu0 0.0
    %733 = vmatprep.subr.mxu0 0.0
    %734 = vmatpush1.msra.mxu0 0.0
    %735 = vmatprep.subr.mxu0 0.0
    %736 = vmatpush1.msra.mxu0 0.0
    %737 = vmatprep.subr.mxu0 0.0
    %738 = vmatpush1.msra.mxu0 0.0
    %739 = vmatprep.subr.mxu0 0.0
    %740 = vmatpush1.msra.mxu0 0.0
    %741 = vmatprep.subr.mxu0 0.0
    %742 = vmatpush1.msra.mxu0 0.0
    %743 = vmatprep.subr.mxu0 0.0
    %744 = vmatpush1.msra.mxu0 0.0
    %745 = vmatprep.subr.mxu0 0.0
    %746 = vmatpush1.msra.mxu0 0.0
    %747 = vmatprep.subr.mxu0 0.0
    %748 = vmatpush1.msra.mxu0 0.0
    %749 = vmatprep.subr.mxu0 0.0
    %750 = vmatpush1.msra.mxu0 0.0
    %751 = vmatprep.subr.mxu0 0.0
    %752 = vmatpush1.msra.mxu0 0.0
    %753 = vmatprep.subr.mxu0 0.0
    %754 = vmatpush1.msra.mxu0 0.0
    %755 = vmatprep.subr.mxu0 0.0
    %756 = vmatpush1.msra.mxu0 0.0
    %757 = vmatprep.subr.mxu0 0.0
    %758 = vmatpush1.msra.mxu0 0.0
    %759 = vmatprep.subr.mxu0 0.0
    %760 = vmatpush1.msra.mxu0 0.0
    %761 = vmatprep.subr.mxu0 0.0
    %762 = vmatpush1.msra.mxu0 0.0
    %763 = vmatprep.subr.mxu0 0.0
    %764 = vmatpush1.msra.mxu0 0.0
    %765 = vmatprep.subr.mxu0 0.0
    %766 = vmatpush1.msra.mxu0 0.0
    %767 = vmatprep.subr.mxu0 0.0
    %768 = vmatpush1.msra.mxu0 0.0
    %769 = vmatprep.subr.mxu0 0.0
    %770 = vmatpush1.msra.mxu0 0.0
    %771 = vmatprep.subr.mxu0 0.0
    %772 = vmatpush1.msra.mxu0 0.0
    %773 = vmatprep.subr.mxu0 0.0
    %774 = vmatpush1.msra.mxu0 0.0
    %775 = vmatprep.subr.mxu0 0.0
    %776 = vmatpush1.msra.mxu0 0.0
    %777 = vmatprep.subr.mxu0 0.0
    %778 = vmatpush1.msra.mxu0 0.0
    %779 = vmatprep.mubr.f32.mxu0 0.0
    %780 = vmatmul.mubr.f32.gmra.mrb[0].mxu0 %v713
    %v781 = vpop.f32.mrb[0].mxu0
    %v782 = vadd.f32 0.0, %v781
    %v783 = vpop.f32.mrb[0].mxu0
    %784 = vdwg.mxu0
    %v786 = vrot.slane %v782, 1
    %v787 = vrot.slane %v782, 2
    %v790 = vadd.f32 %v104, %v786
    %v791 = vadd.f32 %v109, %v787
    %v792 = vtanh.pop %v790
    %v793 = vtanh.pop %v791
    %v794 = vlaneseq
    %v795 = vshrl.u32 %v794, 7
    %v796 = vsub.s32 0, %v795
    %v797 = vrot.slane %v23, %v796
    %v800 = vrot.slane %v792, 7
    %v801 = vrot.slane %v793, 6
    %v802 = vsel %vm197, %v801, %v800
    %v803 = vsel %vm112, %v802, 0
    %805 = vmatprep.subr.mxu0 0.0
    %806 = vmatpush1.msra.mxu0 %v19
    %807 = vmatprep.subr.mxu0 0.0
    %808 = vmatpush1.msra.mxu0 %v20
    %809 = vmatprep.subr.mxu0 0.0
    %810 = vmatpush1.msra.mxu0 %v21
    %811 = vmatprep.subr.mxu0 0.0
    %812 = vmatpush1.msra.mxu0 %v22
    %813 = vmatprep.subr.mxu0 0.0
    %814 = vmatpush1.msra.mxu0 0.0
    %815 = vmatprep.subr.mxu0 0.0
    %816 = vmatpush1.msra.mxu0 0.0
    %817 = vmatprep.subr.mxu0 0.0
    %818 = vmatpush1.msra.mxu0 0.0
    %819 = vmatprep.subr.mxu0 0.0
    %820 = vmatpush1.msra.mxu0 0.0
    %821 = vmatprep.subr.mxu0 0.0
    %822 = vmatpush1.msra.mxu0 0.0
    %823 = vmatprep.subr.mxu0 0.0
    %824 = vmatpush1.msra.mxu0 0.0
    %825 = vmatprep.subr.mxu0 0.0
    %826 = vmatpush1.msra.mxu0 0.0
    %827 = vmatprep.subr.mxu0 0.0
    %828 = vmatpush1.msra.mxu0 0.0
    %829 = vmatprep.subr.mxu0 0.0
    %830 = vmatpush1.msra.mxu0 0.0
    %831 = vmatprep.subr.mxu0 0.0
    %832 = vmatpush1.msra.mxu0 0.0
    %833 = vmatprep.subr.mxu0 0.0
    %834 = vmatpush1.msra.mxu0 0.0
    %835 = vmatprep.subr.mxu0 0.0
    %836 = vmatpush1.msra.mxu0 0.0
    %837 = vmatprep.subr.mxu0 0.0
    %838 = vmatpush1.msra.mxu0 0.0
    %839 = vmatprep.subr.mxu0 0.0
    %840 = vmatpush1.msra.mxu0 0.0
    %841 = vmatprep.subr.mxu0 0.0
    %842 = vmatpush1.msra.mxu0 0.0
    %843 = vmatprep.subr.mxu0 0.0
    %844 = vmatpush1.msra.mxu0 0.0
    %845 = vmatprep.subr.mxu0 0.0
    %846 = vmatpush1.msra.mxu0 0.0
    %847 = vmatprep.subr.mxu0 0.0
    %848 = vmatpush1.msra.mxu0 0.0
    %849 = vmatprep.subr.mxu0 0.0
    %850 = vmatpush1.msra.mxu0 0.0
    %851 = vmatprep.subr.mxu0 0.0
    %852 = vmatpush1.msra.mxu0 0.0
    %853 = vmatprep.subr.mxu0 0.0
    %854 = vmatpush1.msra.mxu0 0.0
    %855 = vmatprep.subr.mxu0 0.0
    %856 = vmatpush1.msra.mxu0 0.0
    %857 = vmatprep.subr.mxu0 0.0
    %858 = vmatpush1.msra.mxu0 0.0
    %859 = vmatprep.subr.mxu0 0.0
    %860 = vmatpush1.msra.mxu0 0.0
    %861 = vmatprep.subr.mxu0 0.0
    %862 = vmatpush1.msra.mxu0 0.0
    %863 = vmatprep.subr.mxu0 0.0
    %864 = vmatpush1.msra.mxu0 0.0
    %865 = vmatprep.subr.mxu0 0.0
    %866 = vmatpush1.msra.mxu0 0.0
    %867 = vmatprep.subr.mxu0 0.0
    %868 = vmatpush1.msra.mxu0 0.0
    %869 = vmatprep.mubr.f32.mxu0 0.0
    %870 = vmatmul.mubr.f32.gmra.mrb[0].mxu0 %v803
    %v871 = vpop.f32.mrb[0].mxu0
    %v872 = vadd.f32 %v797, %v871
    %v873 = vpop.f32.mrb[0].mxu0
    %874 = vdwg.mxu0
    %vm875 = vcmask 123904
    %876 = vst.msk [vmem:[#allocation2] sm:$0x3] %vm875, %v872
    // Predicated region
    $region10: #{rnn_classifier.1} parent=1 // pred_check
      _
    $region11: #{rnn_classifier.1} parent=1 // pred_check_branch
      %878 = sbr.rel (0) target = $region13
    $region12: #{rnn_classifier.1} parent=1 // pred_region
      %s880 = ssub.s32 32, 32
      %881 = vsyncadd [#allocation3], %s880
      %s883 = sshll.u32 [#allocation2], 4
      %s884 = int_to_ptr.vmem [resolvable:$true] %s883
      %886 = dma.vmem_to_hbm [thread:$0]  %s884, 32, %s2, [#allocation3]
    $region13: #{rnn_classifier.1} parent=1 // pred_fallthru
      _
    // Predicated region
    $region14: #{rnn_classifier.1} parent=1 // pred_check
      _
    $region15: #{rnn_classifier.1} parent=1 // pred_check_branch
      %888 = sbr.rel (0) target = $region17
    $region16: #{rnn_classifier.1} parent=1 // pred_region
      %889 = dma.done [#allocation3], 32
    $region17: #{rnn_classifier.1} parent=1 // pred_fallthru
      _
    %890 = vsyncpa [#allocation3], 1

</llo_original>
